<compile_context>
chip_gen: v7x
topology: tpu7x:2x2x1
jax: 0.10.0
libtpu: 0.0.40
codegen_flags: <defaults>
</compile_context>

<pallas_src>
import functools

import jax
import jax.numpy as jnp
from jax.experimental import pallas as pl
from jax.experimental.pallas import tpu as pltpu


LANE = 128  # TPU lane width; feature/hidden dims are padded to this.


def _round_up(x, m):
    return (x + m - 1) // m * m


def _mlp_kernel(xt_ref, w1_ref, b1_ref, wh_ref, bh_ref, wo_ref, bo_ref, out_ref,
                *, num_hidden_layers):
    """One batch tile of the DescriptorBasedDNN forward (transposed layout).

    xt_ref : (Dp, TB)      bf16   -- x^T tile, batch on the lane axis
    w1_ref : (Hp, Dp)      bf16   b1_ref : (Hp, 1)     f32
    wh_ref : (Lh, Hp, Hp)  bf16   bh_ref : (Lh, Hp, 1) f32
    wo_ref : (Hp, 1)       f32    bo_ref : (1, 1)      f32
    out_ref: (1, TB)       f32    -- lane-dense output slab
    """
    # fc1 + relu  (bf16 MXU matmul, f32 accumulate; f32 VPU elementwise)
    h = jnp.dot(w1_ref[...], xt_ref[...],
                preferred_element_type=jnp.float32) + b1_ref[...]
    h = jnp.maximum(h, 0.0)
    # dropout (eval mode) == identity

    # Hidden layers, statically unrolled (num_hidden_layers is a Python int).
    for i in range(num_hidden_layers - 1):
        h = jnp.dot(wh_ref[i], h.astype(jnp.bfloat16),
                    preferred_element_type=jnp.float32) + bh_ref[i]
        h = jnp.maximum(h, 0.0)
        # dropout (eval mode) == identity

    # fc_out as VPU multiply + sublane (XLU) reduce instead of an M=1 MXU
    # matmul, then sigmoid on the EUP. Result is (1, TB): lane-dense store.
    logits = jnp.sum(h * wo_ref[...], axis=0, keepdims=True) + bo_ref[...]
    out_ref[...] = jax.nn.sigmoid(logits)


def descriptor_dnn_forward(x, kernel_params, *, hidden_layers, batch_tile=1024):
    """Batch-tiled Pallas forward. `kernel_params` come from `pack_params`."""
    w1, b1, wh, bh, wo, bo = kernel_params
    hp, dp = w1.shape
    lh = wh.shape[0]
    batch, d_in = x.shape

    # Batch tile: multiple of 128 lanes, clamped to the (padded) batch.
    tb = _round_up(min(batch_tile, _round_up(batch, LANE)), LANE)
    padded_batch = _round_up(batch, tb)
    num_tiles = padded_batch // tb

    # Wrapper-side layout plumbing: pad features to Dp, pad batch to the tile
    # grid, transpose so the batch dim is lane-dense, and cast to bf16
    # (halves the dominant HBM input stream).
    xt = jnp.zeros((dp, padded_batch), jnp.bfloat16)
    xt = xt.at[:d_in, :batch].set(x.astype(jnp.bfloat16).T)

    kernel = functools.partial(_mlp_kernel, num_hidden_layers=hidden_layers)
    const2 = lambda i: (0, 0)
    const3 = lambda i: (0, 0, 0)

    out = pl.pallas_call(
        kernel,
        out_shape=jax.ShapeDtypeStruct((1, padded_batch), jnp.float32),
        grid=(num_tiles,),
        in_specs=[
            pl.BlockSpec((dp, tb), lambda i: (0, i)),   # x^T: streamed per tile
            pl.BlockSpec((hp, dp), const2),             # weights: resident
            pl.BlockSpec((hp, 1), const2),
            pl.BlockSpec((lh, hp, hp), const3),
            pl.BlockSpec((lh, hp, 1), const3),
            pl.BlockSpec((hp, 1), const2),
            pl.BlockSpec((1, 1), const2),
        ],
        out_specs=pl.BlockSpec((1, tb), lambda i: (0, i)),
        compiler_params=pltpu.CompilerParams(
            dimension_semantics=("parallel",),
            vmem_limit_bytes=32 * 1024 * 1024,
        ),
    )(xt, w1, b1, wh, bh, wo, bo)

    return out[0, :batch].reshape(batch, 1)


def init_params(key, input_size, hidden_nodes, hidden_layers):
    """nn.Linear-style init (uniform +-1/sqrt(fan_in)), PyTorch (out, in) layout."""
    keys = jax.random.split(key, 3)

    def linear(k, fan_in, fan_out):
        bound = 1.0 / jnp.sqrt(jnp.float32(fan_in))
        kw, kb = jax.random.split(k)
        w = jax.random.uniform(kw, (fan_out, fan_in), jnp.float32, -bound, bound)
        b = jax.random.uniform(kb, (fan_out,), jnp.float32, -bound, bound)
        return w, b

    w1, b1 = linear(keys[0], input_size, hidden_nodes)
    hidden = []
    hkeys = jax.random.split(keys[1], max(hidden_layers - 1, 1))
    for i in range(hidden_layers - 1):
        hidden.append(linear(hkeys[i], hidden_nodes, hidden_nodes))
    wo, bo = linear(keys[2], hidden_nodes, 1)
    return {"w1": w1, "b1": b1, "hidden": hidden, "wo": wo, "bo": bo}


def pack_params(p, input_size, hidden_nodes, hidden_layers):
    """Pad params to 128-lane dims, stack hidden layers, cast matmul weights to bf16.

    Zero padding is exact: padded hidden units get zero weights and zero bias,
    so ReLU(0) = 0 propagates and padded units never contribute to the output.
    """
    dp = _round_up(input_size, LANE)
    hp = _round_up(hidden_nodes, LANE)
    lh = max(hidden_layers - 1, 1)  # >= 1 so Mosaic never sees a 0-sized operand

    w1 = jnp.zeros((hp, dp), jnp.float32).at[:hidden_nodes, :input_size].set(p["w1"])
    b1 = jnp.zeros((hp, 1), jnp.float32).at[:hidden_nodes, 0].set(p["b1"])
    wh = jnp.zeros((lh, hp, hp), jnp.float32)
    bh = jnp.zeros((lh, hp, 1), jnp.float32)
    for i, (w, b) in enumerate(p["hidden"]):
        wh = wh.at[i, :hidden_nodes, :hidden_nodes].set(w)
        bh = bh.at[i, :hidden_nodes, 0].set(b)
    wo = jnp.zeros((hp, 1), jnp.float32).at[:hidden_nodes, 0].set(p["wo"][0])
    bo = p["bo"].reshape(1, 1).astype(jnp.float32)

    return (w1.astype(jnp.bfloat16), b1, wh.astype(jnp.bfloat16), bh, wo, bo)


def reference_forward(x, p, hidden_layers):
    """Pure-JAX f32 reference for correctness checking."""
    h = jax.nn.relu(x @ p["w1"].T + p["b1"])
    for i in range(hidden_layers - 1):
        w, b = p["hidden"][i]
        h = jax.nn.relu(h @ w.T + b)
    return jax.nn.sigmoid(h @ p["wo"].T + p["bo"])


if __name__ == "__main__":
    # Small shapes consistent with the module (descriptor-vector MLP), chosen
    # to exercise feature padding, batch padding and a multi-tile grid.
    batch = 300
    input_size = 37
    hidden_nodes = 32
    hidden_layers = 3
    dropout_rate = 0.5  # unused in eval-mode forward

    key = jax.random.PRNGKey(0)
    kx, kp = jax.random.split(key)
    x = jax.random.normal(kx, (batch, input_size), jnp.float32)
    params = init_params(kp, input_size, hidden_nodes, hidden_layers)
    kernel_params = pack_params(params, input_size, hidden_nodes, hidden_layers)

    out = descriptor_dnn_forward(x, kernel_params, hidden_layers=hidden_layers,
                                 batch_tile=128)
    out = jax.block_until_ready(out)

    ref = reference_forward(x, params, hidden_layers)
    assert out.shape == (batch, 1)
    # bf16 matmul inputs (f32 accumulate) -> loosen tolerance vs f32 reference.
    assert jnp.allclose(out, ref, atol=2e-2, rtol=2e-2), (
        f"mismatch vs. reference, max abs err {jnp.max(jnp.abs(out - ref)):.3e}")

    print("KERNEL_OK")
</pallas_src>

<mosaic_0001>
module attributes {stable_mosaic.version = 11 : i64} {
  func.func @_mlp_kernel(%arg0: i32, %arg1: memref<128x128xbf16, #tpu.memory_space<vmem>>, %arg2: memref<128x128xbf16, #tpu.memory_space<vmem>>, %arg3: memref<128x1xf32, #tpu.memory_space<vmem>>, %arg4: memref<2x128x128xbf16, #tpu.memory_space<vmem>>, %arg5: memref<2x128x1xf32, #tpu.memory_space<vmem>>, %arg6: memref<128x1xf32, #tpu.memory_space<vmem>>, %arg7: memref<1x1xf32, #tpu.memory_space<vmem>>, %arg8: memref<1x128xf32, #tpu.memory_space<vmem>>) attributes {dimension_semantics = [#tpu.dimension_semantics<parallel>], iteration_bounds = array<i64: 3>, scalar_prefetch = 0 : i64, scratch_operands = 0 : i64, tpu.core_type = #tpu.core_type<tc>, window_params = [{transform_indices = @transform_0, window_bounds = array<i64: 128, 128>}, {pipeline_mode = #tpu.pipeline_mode<synchronous>, transform_indices = @transform_1, window_bounds = array<i64: 128, 128>}, {pipeline_mode = #tpu.pipeline_mode<synchronous>, transform_indices = @transform_2, window_bounds = array<i64: 128, 1>}, {pipeline_mode = #tpu.pipeline_mode<synchronous>, transform_indices = @transform_3, window_bounds = array<i64: 2, 128, 128>}, {pipeline_mode = #tpu.pipeline_mode<synchronous>, transform_indices = @transform_4, window_bounds = array<i64: 2, 128, 1>}, {pipeline_mode = #tpu.pipeline_mode<synchronous>, transform_indices = @transform_5, window_bounds = array<i64: 128, 1>}, {pipeline_mode = #tpu.pipeline_mode<synchronous>, transform_indices = @transform_6, window_bounds = array<i64: 1, 1>}, {transform_indices = @transform_7, window_bounds = array<i64: 1, 128>}]} {
    %c0 = arith.constant 0 : index
    %c0_0 = arith.constant 0 : index
    %0 = vector.load %arg2[%c0, %c0_0] : memref<128x128xbf16, #tpu.memory_space<vmem>>, vector<128x128xbf16>
    %c0_1 = arith.constant 0 : index
    %c0_2 = arith.constant 0 : index
    %1 = vector.load %arg1[%c0_1, %c0_2] : memref<128x128xbf16, #tpu.memory_space<vmem>>, vector<128x128xbf16>
    %cst = arith.constant dense<0.000000e+00> : vector<128x128xf32>
    %2 = tpu.matmul %0, %1, %cst {dimension_numbers = #tpu.dot_dimension_numbers<[1], [0], [0], [1], [0, 0, 1, 1], [], []>} : vector<128x128xbf16>, vector<128x128xbf16>, vector<128x128xf32> -> vector<128x128xf32>
    %c0_3 = arith.constant 0 : index
    %c0_4 = arith.constant 0 : index
    %3 = vector.load %arg3[%c0_3, %c0_4] : memref<128x1xf32, #tpu.memory_space<vmem>>, vector<128x1xf32>
    %4 = vector.broadcast %3 : vector<128x1xf32> to vector<128x128xf32>
    %5 = arith.addf %2, %4 : vector<128x128xf32>
    %cst_5 = arith.constant 0.000000e+00 : f32
    %6 = vector.broadcast %cst_5 : f32 to vector<128x128xf32>
    %7 = arith.maximumf %5, %6 : vector<128x128xf32>
    %c0_6 = arith.constant 0 : index
    %c0_7 = arith.constant 0 : index
    %c0_8 = arith.constant 0 : index
    %8 = vector.load %arg4[%c0_6, %c0_7, %c0_8] : memref<2x128x128xbf16, #tpu.memory_space<vmem>>, vector<1x128x128xbf16>
    %9 = vector.shape_cast %8 : vector<1x128x128xbf16> to vector<128x128xbf16>
    %10 = arith.truncf %7 : vector<128x128xf32> to vector<128x128xbf16>
    %cst_9 = arith.constant dense<0.000000e+00> : vector<128x128xf32>
    %11 = tpu.matmul %9, %10, %cst_9 {dimension_numbers = #tpu.dot_dimension_numbers<[1], [0], [0], [1], [0, 0, 1, 1], [], []>} : vector<128x128xbf16>, vector<128x128xbf16>, vector<128x128xf32> -> vector<128x128xf32>
    %c0_10 = arith.constant 0 : index
    %c0_11 = arith.constant 0 : index
    %c0_12 = arith.constant 0 : index
    %12 = vector.load %arg5[%c0_10, %c0_11, %c0_12] : memref<2x128x1xf32, #tpu.memory_space<vmem>>, vector<1x128x1xf32>
    %13 = vector.shape_cast %12 : vector<1x128x1xf32> to vector<128x1xf32>
    %14 = vector.broadcast %13 : vector<128x1xf32> to vector<128x128xf32>
    %15 = arith.addf %11, %14 : vector<128x128xf32>
    %cst_13 = arith.constant 0.000000e+00 : f32
    %16 = vector.broadcast %cst_13 : f32 to vector<128x128xf32>
    %17 = arith.maximumf %15, %16 : vector<128x128xf32>
    %c1 = arith.constant 1 : index
    %c0_14 = arith.constant 0 : index
    %c0_15 = arith.constant 0 : index
    %18 = vector.load %arg4[%c1, %c0_14, %c0_15] : memref<2x128x128xbf16, #tpu.memory_space<vmem>>, vector<1x128x128xbf16>
    %19 = vector.shape_cast %18 : vector<1x128x128xbf16> to vector<128x128xbf16>
    %20 = arith.truncf %17 : vector<128x128xf32> to vector<128x128xbf16>
    %cst_16 = arith.constant dense<0.000000e+00> : vector<128x128xf32>
    %21 = tpu.matmul %19, %20, %cst_16 {dimension_numbers = #tpu.dot_dimension_numbers<[1], [0], [0], [1], [0, 0, 1, 1], [], []>} : vector<128x128xbf16>, vector<128x128xbf16>, vector<128x128xf32> -> vector<128x128xf32>
    %c1_17 = arith.constant 1 : index
    %c0_18 = arith.constant 0 : index
    %c0_19 = arith.constant 0 : index
    %22 = vector.load %arg5[%c1_17, %c0_18, %c0_19] : memref<2x128x1xf32, #tpu.memory_space<vmem>>, vector<1x128x1xf32>
    %23 = vector.shape_cast %22 : vector<1x128x1xf32> to vector<128x1xf32>
    %24 = vector.broadcast %23 : vector<128x1xf32> to vector<128x128xf32>
    %25 = arith.addf %21, %24 : vector<128x128xf32>
    %cst_20 = arith.constant 0.000000e+00 : f32
    %26 = vector.broadcast %cst_20 : f32 to vector<128x128xf32>
    %27 = arith.maximumf %25, %26 : vector<128x128xf32>
    %c0_21 = arith.constant 0 : index
    %c0_22 = arith.constant 0 : index
    %28 = vector.load %arg6[%c0_21, %c0_22] : memref<128x1xf32, #tpu.memory_space<vmem>>, vector<128x1xf32>
    %29 = vector.broadcast %28 : vector<128x1xf32> to vector<128x128xf32>
    %30 = arith.mulf %27, %29 : vector<128x128xf32>
    %cst_23 = arith.constant dense<0.000000e+00> : vector<128xf32>
    %31 = vector.multi_reduction <add>, %30, %cst_23 [0] : vector<128x128xf32> to vector<128xf32>
    %32 = vector.shape_cast %31 : vector<128xf32> to vector<1x128xf32>
    %c0_24 = arith.constant 0 : index
    %c0_25 = arith.constant 0 : index
    %33 = vector.load %arg7[%c0_24, %c0_25] : memref<1x1xf32, #tpu.memory_space<vmem>>, vector<1x1xf32>
    %34 = vector.broadcast %33 : vector<1x1xf32> to vector<1x128xf32>
    %35 = arith.addf %32, %34 : vector<1x128xf32>
    %36 = arith.negf %35 : vector<1x128xf32>
    %37 = math.exp %36 : vector<1x128xf32>
    %cst_26 = arith.constant 1.000000e+00 : f32
    %38 = vector.broadcast %cst_26 : f32 to vector<1x128xf32>
    %39 = arith.addf %38, %37 : vector<1x128xf32>
    %40 = arith.divf %38, %39 : vector<1x128xf32>
    %c0_27 = arith.constant 0 : index
    %c0_28 = arith.constant 0 : index
    %41 = vector.load %arg8[%c0_27, %c0_28] : memref<1x128xf32, #tpu.memory_space<vmem>>, vector<1x128xf32>
    tpu.vector_store %arg8[%c0_27, %c0_28], %40 {strides = array<i32>} : memref<1x128xf32, #tpu.memory_space<vmem>>, vector<1x128xf32>,
    return
  }
  func.func @transform_0(%arg0: i32) -> (i32, i32) {
    %c0_i32 = arith.constant 0 : i32
    %c0_i32_0 = arith.constant 0 : i32
    return %c0_i32, %arg0 : i32, i32
  }
  func.func @transform_1(%arg0: i32) -> (i32, i32) {
    %c0_i32 = arith.constant 0 : i32
    %c0_i32_0 = arith.constant 0 : i32
    %c0_i32_1 = arith.constant 0 : i32
    return %c0_i32, %c0_i32_0 : i32, i32
  }
  func.func @transform_2(%arg0: i32) -> (i32, i32) {
    %c0_i32 = arith.constant 0 : i32
    %c0_i32_0 = arith.constant 0 : i32
    %c0_i32_1 = arith.constant 0 : i32
    return %c0_i32, %c0_i32_0 : i32, i32
  }
  func.func @transform_3(%arg0: i32) -> (i32, i32, i32) {
    %c0_i32 = arith.constant 0 : i32
    %c0_i32_0 = arith.constant 0 : i32
    %c0_i32_1 = arith.constant 0 : i32
    %c0_i32_2 = arith.constant 0 : i32
    return %c0_i32, %c0_i32_0, %c0_i32_1 : i32, i32, i32
  }
  func.func @transform_4(%arg0: i32) -> (i32, i32, i32) {
    %c0_i32 = arith.constant 0 : i32
    %c0_i32_0 = arith.constant 0 : i32
    %c0_i32_1 = arith.constant 0 : i32
    %c0_i32_2 = arith.constant 0 : i32
    return %c0_i32, %c0_i32_0, %c0_i32_1 : i32, i32, i32
  }
  func.func @transform_5(%arg0: i32) -> (i32, i32) {
    %c0_i32 = arith.constant 0 : i32
    %c0_i32_0 = arith.constant 0 : i32
    %c0_i32_1 = arith.constant 0 : i32
    return %c0_i32, %c0_i32_0 : i32, i32
  }
  func.func @transform_6(%arg0: i32) -> (i32, i32) {
    %c0_i32 = arith.constant 0 : i32
    %c0_i32_0 = arith.constant 0 : i32
    %c0_i32_1 = arith.constant 0 : i32
    return %c0_i32, %c0_i32_0 : i32, i32
  }
  func.func @transform_7(%arg0: i32) -> (i32, i32) {
    %c0_i32 = arith.constant 0 : i32
    %c0_i32_0 = arith.constant 0 : i32
    return %c0_i32, %arg0 : i32, i32
  }
}

</mosaic_0001>

<llo_original>
// kernel: tpu_custom_call.1
$region0: #{tpu_custom_call.1}
  #allocation0 [shape = 'u32[]', space=smem, size = 0x4, offset = 0x4, fixed_abs, tag = 'smem constant byte address 0x4 - core index']
  #allocation1 [shape = 'u32[144,128]{1,0:T(1,128)}', space=vmem, size = 0x12000, scoped, tag = 'internal scratch']
  #allocation2 [shape = 'f32[1,1]{1,0:T(1,128)S(1)}', space=vmem, size = 0x200, scoped, tag = 'scoped memory for tpu_custom_call.1']
  %s0 = inlined_call_operand.vmem [shape: bf16[128,384], index: 0, kind: input, shape index: {}]
  %s1 = inlined_call_operand.vmem [shape: bf16[128,128], index: 1, kind: input, shape index: {}]
  %s2 = inlined_call_operand.vmem [shape: f32[128,1], index: 2, kind: input, shape index: {}]
  %s3 = inlined_call_operand.vmem [shape: bf16[2,128,128], index: 3, kind: input, shape index: {}]
  %s4 = inlined_call_operand.vmem [shape: f32[2,128,1], index: 4, kind: input, shape index: {}]
  %s5 = inlined_call_operand.vmem [shape: f32[128,1], index: 5, kind: input, shape index: {}]
  %s6 = inlined_call_operand.<no memory space> [shape: f32[1,1], index: 6, kind: input, shape index: {}]
  %s7 = inlined_call_operand.hbm [shape: f32[1,384], index: 7, kind: output, shape index: {}]
  %s8 = sld [smem:[#allocation0]]
  $region102: #{tpu_custom_call.1} parent=0
    _
  %s10 = ssub.s32 1, %s8
  %s11 = scalar_select 0, %s10, %s8
  %v12 = vstv %s6
  %13 = vst [vmem:[#allocation2] sm:$0x1] %v12
  $region1: #{tpu_custom_call.1} parent=0
    #allocation3 [shape = 'u8[65536]{0}', space=vmem, size = 0x10000, scoped, tag = 'input window, operand 0']
    #allocation4 [shape = 'u8[1024]{0}', space=vmem, size = 0x400, scoped, tag = 'output window, operand 0']
    #allocation5 [shape = 's32[2]{0}', space=sflag, size = 0x8, scoped, tag = 'scoped memory for tpu_custom_call.1']
    %14 = vsyncpa [#allocation5], 0
    %s15 = scalar_lea.sflag [#allocation5], 1
    %16 = vsyncpa %s15, 0
    loop: start=0, step=1, limit=5
    $region2: #{tpu_custom_call.1} parent=1 // loop_pre_header
      _
    $region3: #{tpu_custom_call.1} parent=1 // loop_header
      %s18 = sphi 0, %s22
      %p19 = scmp.ge.s32.totalorder %s18, 5
      %s28 = sphi 0, %s30
      %s31 = sphi 0, %s28
      %s32 = sphi 0, %s31
      %s48 = sphi 0, %s32
      %s52 = sphi 0, %s52
      %s54 = sphi 0, %s52
      %s55 = sphi 0, %s54
      %s69 = sphi 0, %s55
      %s73 = sphi 0, %s73
      %s75 = sphi 0, %s73
      %s76 = sphi 0, %s75
      %s90 = sphi 0, %s76
      %s94 = sphi 0, %s94
      %s96 = sphi 0, %s94
      %s97 = sphi 0, %s96
      %s111 = sphi 0, %s97
      %s115 = sphi 0, %s115
      %s117 = sphi 0, %s115
      %s118 = sphi 0, %s117
      %s132 = sphi 0, %s118
      %s136 = sphi 0, %s136
      %s138 = sphi 0, %s136
      %s139 = sphi 0, %s138
      %s153 = sphi 0, %s139
      %s157 = sphi 0, %s157
      %s159 = sphi 0, %s157
      %s160 = sphi 0, %s159
      %s174 = sphi 0, %s160
      %s180 = sphi 0, %s182
      %s183 = sphi 0, %s180
      %s184 = sphi 0, %s183
      %s200 = sphi 0, %s184
    $region4: #{tpu_custom_call.1} parent=1 // loop_header_branch
      %21 = sbr.rel (%p19) target = $region8
    $region5: #{tpu_custom_call.1} parent=1 // loop_body
      %s23 = ssub.s32 %s18, 1
      %s24 = ssub.s32 %s18, 2
      %s25 = sadd.s32 %s18, 1
      %s26 = ssub.s32 %s18, %s25
      %p27 = scmp.eq.s32.totalorder %s26, 0
      %s29 = sadd.s32 %s28, 1
      %s30 = scalar_select %p27, %s28, %s29
      %p33 = pneg %p27
      %p34 = scmp.eq.s32.totalorder %s18, 2
      %p35 = por %p33, %p34
      %p36 = scmp.ne.s32.totalorder %s28, %s31
      %p37 = scmp.eq.s32.totalorder %s18, 0
      %p38 = por %p36, %p37
      %p39 = scmp.ne.s32.totalorder %s28, %s31
      %p40 = scmp.eq.s32.totalorder %s23, 2
      %p41 = por %p39, %p40
      %p42 = scmp.ne.s32.totalorder %s31, %s32
      %p43 = scmp.eq.s32.totalorder %s23, 0
      %p44 = por %p42, %p43
      %p45 = scmp.ne.s32.totalorder %s31, %s32
      %p46 = scmp.eq.s32.totalorder %s24, 2
      %p47 = por %p45, %p46
      %p49 = scmp.ne.s32.totalorder %s32, %s48
      %p50 = scmp.eq.s32.totalorder %s24, 0
      %p51 = por %p49, %p50
      %s53 = sadd.s32 %s52, 1
      %p56 = scmp.eq.s32.totalorder %s18, 2
      %p57 = scmp.ne.s32.totalorder %s52, %s54
      %p58 = scmp.eq.s32.totalorder %s18, 0
      %p59 = por %p57, %p58
      %p60 = scmp.ne.s32.totalorder %s52, %s54
      %p61 = scmp.eq.s32.totalorder %s23, 2
      %p62 = por %p60, %p61
      %p63 = scmp.ne.s32.totalorder %s54, %s55
      %p64 = scmp.eq.s32.totalorder %s23, 0
      %p65 = por %p63, %p64
      %p66 = scmp.ne.s32.totalorder %s54, %s55
      %p67 = scmp.eq.s32.totalorder %s24, 2
      %p68 = por %p66, %p67
      %p70 = scmp.ne.s32.totalorder %s55, %s69
      %p71 = scmp.eq.s32.totalorder %s24, 0
      %p72 = por %p70, %p71
      %s74 = sadd.s32 %s73, 1
      %p77 = scmp.eq.s32.totalorder %s18, 2
      %p78 = scmp.ne.s32.totalorder %s73, %s75
      %p79 = scmp.eq.s32.totalorder %s18, 0
      %p80 = por %p78, %p79
      %p81 = scmp.ne.s32.totalorder %s73, %s75
      %p82 = scmp.eq.s32.totalorder %s23, 2
      %p83 = por %p81, %p82
      %p84 = scmp.ne.s32.totalorder %s75, %s76
      %p85 = scmp.eq.s32.totalorder %s23, 0
      %p86 = por %p84, %p85
      %p87 = scmp.ne.s32.totalorder %s75, %s76
      %p88 = scmp.eq.s32.totalorder %s24, 2
      %p89 = por %p87, %p88
      %p91 = scmp.ne.s32.totalorder %s76, %s90
      %p92 = scmp.eq.s32.totalorder %s24, 0
      %p93 = por %p91, %p92
      %s95 = sadd.s32 %s94, 1
      %p98 = scmp.eq.s32.totalorder %s18, 2
      %p99 = scmp.ne.s32.totalorder %s94, %s96
      %p100 = scmp.eq.s32.totalorder %s18, 0
      %p101 = por %p99, %p100
      %p102 = scmp.ne.s32.totalorder %s94, %s96
      %p103 = scmp.eq.s32.totalorder %s23, 2
      %p104 = por %p102, %p103
      %p105 = scmp.ne.s32.totalorder %s96, %s97
      %p106 = scmp.eq.s32.totalorder %s23, 0
      %p107 = por %p105, %p106
      %p108 = scmp.ne.s32.totalorder %s96, %s97
      %p109 = scmp.eq.s32.totalorder %s24, 2
      %p110 = por %p108, %p109
      %p112 = scmp.ne.s32.totalorder %s97, %s111
      %p113 = scmp.eq.s32.totalorder %s24, 0
      %p114 = por %p112, %p113
      %s116 = sadd.s32 %s115, 1
      %p119 = scmp.eq.s32.totalorder %s18, 2
      %p120 = scmp.ne.s32.totalorder %s115, %s117
      %p121 = scmp.eq.s32.totalorder %s18, 0
      %p122 = por %p120, %p121
      %p123 = scmp.ne.s32.totalorder %s115, %s117
      %p124 = scmp.eq.s32.totalorder %s23, 2
      %p125 = por %p123, %p124
      %p126 = scmp.ne.s32.totalorder %s117, %s118
      %p127 = scmp.eq.s32.totalorder %s23, 0
      %p128 = por %p126, %p127
      %p129 = scmp.ne.s32.totalorder %s117, %s118
      %p130 = scmp.eq.s32.totalorder %s24, 2
      %p131 = por %p129, %p130
      %p133 = scmp.ne.s32.totalorder %s118, %s132
      %p134 = scmp.eq.s32.totalorder %s24, 0
      %p135 = por %p133, %p134
      %s137 = sadd.s32 %s136, 1
      %p140 = scmp.eq.s32.totalorder %s18, 2
      %p141 = scmp.ne.s32.totalorder %s136, %s138
      %p142 = scmp.eq.s32.totalorder %s18, 0
      %p143 = por %p141, %p142
      %p144 = scmp.ne.s32.totalorder %s136, %s138
      %p145 = scmp.eq.s32.totalorder %s23, 2
      %p146 = por %p144, %p145
      %p147 = scmp.ne.s32.totalorder %s138, %s139
      %p148 = scmp.eq.s32.totalorder %s23, 0
      %p149 = por %p147, %p148
      %p150 = scmp.ne.s32.totalorder %s138, %s139
      %p151 = scmp.eq.s32.totalorder %s24, 2
      %p152 = por %p150, %p151
      %p154 = scmp.ne.s32.totalorder %s139, %s153
      %p155 = scmp.eq.s32.totalorder %s24, 0
      %p156 = por %p154, %p155
      %s158 = sadd.s32 %s157, 1
      %p161 = scmp.eq.s32.totalorder %s18, 2
      %p162 = scmp.ne.s32.totalorder %s157, %s159
      %p163 = scmp.eq.s32.totalorder %s18, 0
      %p164 = por %p162, %p163
      %p165 = scmp.ne.s32.totalorder %s157, %s159
      %p166 = scmp.eq.s32.totalorder %s23, 2
      %p167 = por %p165, %p166
      %p168 = scmp.ne.s32.totalorder %s159, %s160
      %p169 = scmp.eq.s32.totalorder %s23, 0
      %p170 = por %p168, %p169
      %p171 = scmp.ne.s32.totalorder %s159, %s160
      %p172 = scmp.eq.s32.totalorder %s24, 2
      %p173 = por %p171, %p172
      %p175 = scmp.ne.s32.totalorder %s160, %s174
      %p176 = scmp.eq.s32.totalorder %s24, 0
      %p177 = por %p175, %p176
      %s178 = ssub.s32 %s18, %s25
      %p179 = scmp.eq.s32.totalorder %s178, 0
      %s181 = sadd.s32 %s180, 1
      %s182 = scalar_select %p179, %s180, %s181
      %p185 = pneg %p179
      %p186 = scmp.eq.s32.totalorder %s18, 2
      %p187 = por %p185, %p186
      %p188 = scmp.ne.s32.totalorder %s180, %s183
      %p189 = scmp.eq.s32.totalorder %s18, 0
      %p190 = por %p188, %p189
      %p191 = scmp.ne.s32.totalorder %s180, %s183
      %p192 = scmp.eq.s32.totalorder %s23, 2
      %p193 = por %p191, %p192
      %p194 = scmp.ne.s32.totalorder %s183, %s184
      %p195 = scmp.eq.s32.totalorder %s23, 0
      %p196 = por %p194, %p195
      %p197 = scmp.ne.s32.totalorder %s183, %s184
      %p198 = scmp.eq.s32.totalorder %s24, 2
      %p199 = por %p197, %p198
      %p201 = scmp.ne.s32.totalorder %s184, %s200
      %p202 = scmp.eq.s32.totalorder %s24, 0
      %p203 = por %p201, %p202
      %p204 = scmp.le.s32.totalorder 1, %s18
      %p205 = scmp.lt.s32.totalorder %s18, 4
      %p206 = pnand %p204, %p205
      %p207 = pneg %p206
      // Predicated region
      $region9: #{tpu_custom_call.1} parent=5 // pred_check
        _
      $region10: #{tpu_custom_call.1} parent=5 // pred_check_branch
        %209 = sbr.rel (%p206) target = $region12
      $region11: #{tpu_custom_call.1} parent=5 // pred_region
        %s210 = ssub.s32 %s18, 1
        // Predicated region
        $region13: #{tpu_custom_call.1} parent=11 // pred_check
          %p211 = pneg %p65
        $region14: #{tpu_custom_call.1} parent=11 // pred_check_branch
          %213 = sbr.rel (%p211) target = $region16
        $region15: #{tpu_custom_call.1} parent=11 // pred_region
          _
        $region16: #{tpu_custom_call.1} parent=11 // pred_fallthru
          _
        // Predicated region
        $region17: #{tpu_custom_call.1} parent=11 // pred_check
          %p214 = pneg %p86
        $region18: #{tpu_custom_call.1} parent=11 // pred_check_branch
          %216 = sbr.rel (%p214) target = $region20
        $region19: #{tpu_custom_call.1} parent=11 // pred_region
          _
        $region20: #{tpu_custom_call.1} parent=11 // pred_fallthru
          _
        // Predicated region
        $region21: #{tpu_custom_call.1} parent=11 // pred_check
          %p217 = pneg %p107
        $region22: #{tpu_custom_call.1} parent=11 // pred_check_branch
          %219 = sbr.rel (%p217) target = $region24
        $region23: #{tpu_custom_call.1} parent=11 // pred_region
          _
        $region24: #{tpu_custom_call.1} parent=11 // pred_fallthru
          _
        // Predicated region
        $region25: #{tpu_custom_call.1} parent=11 // pred_check
          %p220 = pneg %p128
        $region26: #{tpu_custom_call.1} parent=11 // pred_check_branch
          %222 = sbr.rel (%p220) target = $region28
        $region27: #{tpu_custom_call.1} parent=11 // pred_region
          _
        $region28: #{tpu_custom_call.1} parent=11 // pred_fallthru
          _
        // Predicated region
        $region29: #{tpu_custom_call.1} parent=11 // pred_check
          %p223 = pneg %p149
        $region30: #{tpu_custom_call.1} parent=11 // pred_check_branch
          %225 = sbr.rel (%p223) target = $region32
        $region31: #{tpu_custom_call.1} parent=11 // pred_region
          _
        $region32: #{tpu_custom_call.1} parent=11 // pred_fallthru
          _
        // Predicated region
        $region33: #{tpu_custom_call.1} parent=11 // pred_check
          %p226 = pneg %p170
        $region34: #{tpu_custom_call.1} parent=11 // pred_check_branch
          %228 = sbr.rel (%p226) target = $region36
        $region35: #{tpu_custom_call.1} parent=11 // pred_region
          _
        $region36: #{tpu_custom_call.1} parent=11 // pred_fallthru
          _
      $region12: #{tpu_custom_call.1} parent=5 // pred_fallthru
        _
      %p229 = scmp.lt.s32.totalorder %s18, 3
      // Predicated region
      $region37: #{tpu_custom_call.1} parent=5 // pred_check
        %p230 = pneg %p229
      $region38: #{tpu_custom_call.1} parent=5 // pred_check_branch
        %232 = sbr.rel (%p230) target = $region40
      $region39: #{tpu_custom_call.1} parent=5 // pred_region
        // Predicated region
        $region41: #{tpu_custom_call.1} parent=39 // pred_check
          %p233 = pneg %p38
        $region42: #{tpu_custom_call.1} parent=39 // pred_check_branch
          %235 = sbr.rel (%p233) target = $region44
        $region43: #{tpu_custom_call.1} parent=39 // pred_region
          %s236 = sand.u32 %s28, 1
          %s237 = sand.u32 %s28, 1
          %s238 = smul.addr %s237, 64
          %s239 = scalar_lea.vmem [#allocation3], %s238
          %s240 = smul.addr %s18, 4
          %s241 = scalar_lea.vmem %s0, %s240
          // Predicated region
          $region45: #{tpu_custom_call.1} parent=43 // pred_check
            _
          $region46: #{tpu_custom_call.1} parent=43 // pred_check_branch
            %243 = sbr.rel (0) target = $region48
          $region47: #{tpu_custom_call.1} parent=43 // pred_region
            // Predicated region
            $region49: #{tpu_custom_call.1} parent=47 // pred_check
              _
            $region50: #{tpu_custom_call.1} parent=47 // pred_check_branch
              %245 = sbr.rel target = $region52
            $region51: #{tpu_custom_call.1} parent=47 // pred_region
              // Predicated region
              $region64: #{tpu_custom_call.1} parent=51 // pred_check
                _
              $region65: #{tpu_custom_call.1} parent=51 // pred_check_branch
                %290 = sbr.rel (0) target = $region67
              $region66: #{tpu_custom_call.1} parent=51 // pred_region
                loop: start=0, step=1, limit=1
                $region68: #{tpu_custom_call.1} parent=66 // loop_pre_header
                  _
                $region69: #{tpu_custom_call.1} parent=66 // loop_header
                  %s292 = sphi 0, %s296
                  %p293 = scmp.ge.s32.totalorder %s292, 1
                  %s297 = sphi %s241, %s241
                  %s298 = sphi %s239, %s239
                $region70: #{tpu_custom_call.1} parent=66 // loop_header_branch
                  %295 = sbr.rel (%p293) target = $region74
                $region71: #{tpu_custom_call.1} parent=66 // loop_body
                  _
                $region72: #{tpu_custom_call.1} parent=66 // loop_footer
                  %s296 = sadd.s32 1, %s292
                $region73: #{tpu_custom_call.1} parent=66 // loop_footer_branch
                  %291 = sbr.rel target = $region69
                $region74: #{tpu_custom_call.1} parent=66 // loop_exit
                  _
                loop: start=0, step=1, limit=1
                $region75: #{tpu_custom_call.1} parent=66 // loop_pre_header
                  _
                $region76: #{tpu_custom_call.1} parent=66 // loop_header
                  %s301 = sphi 0, %s305
                  %p302 = scmp.ge.s32.totalorder %s301, 1
                  %s306 = sphi %s241, %s241
                  %s307 = sphi %s239, %s239
                $region77: #{tpu_custom_call.1} parent=66 // loop_header_branch
                  %304 = sbr.rel (%p302) target = $region81
                $region78: #{tpu_custom_call.1} parent=66 // loop_body
                  %v308 = vld [vmem:[%s306] sm:$0xf]
                  %309 = vst [vmem:[%s307] sm:$0xf] %v308
                  %v310 = vld [vmem:[%s306 + $0xc] sm:$0xf]
                  %311 = vst [vmem:[%s307 + $0x4] sm:$0xf] %v310
                  %v312 = vld [vmem:[%s306 + $0x18] sm:$0xf]
                  %313 = vst [vmem:[%s307 + $0x8] sm:$0xf] %v312
                  %v314 = vld [vmem:[%s306 + $0x24] sm:$0xf]
                  %315 = vst [vmem:[%s307 + $0xc] sm:$0xf] %v314
                  %v316 = vld [vmem:[%s306 + $0x30] sm:$0xf]
                  %317 = vst [vmem:[%s307 + $0x10] sm:$0xf] %v316
                  %v318 = vld [vmem:[%s306 + $0x3c] sm:$0xf]
                  %319 = vst [vmem:[%s307 + $0x14] sm:$0xf] %v318
                  %v320 = vld [vmem:[%s306 + $0x48] sm:$0xf]
                  %321 = vst [vmem:[%s307 + $0x18] sm:$0xf] %v320
                  %v322 = vld [vmem:[%s306 + $0x54] sm:$0xf]
                  %323 = vst [vmem:[%s307 + $0x1c] sm:$0xf] %v322
                  %v324 = vld [vmem:[%s306 + $0x60] sm:$0xf]
                  %325 = vst [vmem:[%s307 + $0x20] sm:$0xf] %v324
                  %v326 = vld [vmem:[%s306 + $0x6c] sm:$0xf]
                  %327 = vst [vmem:[%s307 + $0x24] sm:$0xf] %v326
                  %v328 = vld [vmem:[%s306 + $0x78] sm:$0xf]
                  %329 = vst [vmem:[%s307 + $0x28] sm:$0xf] %v328
                  %v330 = vld [vmem:[%s306 + $0x84] sm:$0xf]
                  %331 = vst [vmem:[%s307 + $0x2c] sm:$0xf] %v330
                  %v332 = vld [vmem:[%s306 + $0x90] sm:$0xf]
                  %333 = vst [vmem:[%s307 + $0x30] sm:$0xf] %v332
                  %v334 = vld [vmem:[%s306 + $0x9c] sm:$0xf]
                  %335 = vst [vmem:[%s307 + $0x34] sm:$0xf] %v334
                  %v336 = vld [vmem:[%s306 + $0xa8] sm:$0xf]
                  %337 = vst [vmem:[%s307 + $0x38] sm:$0xf] %v336
                  %v338 = vld [vmem:[%s306 + $0xb4] sm:$0xf]
                  %339 = vst [vmem:[%s307 + $0x3c] sm:$0xf] %v338
                $region79: #{tpu_custom_call.1} parent=66 // loop_footer
                  %s305 = sadd.s32 1, %s301
                $region80: #{tpu_custom_call.1} parent=66 // loop_footer_branch
                  %300 = sbr.rel target = $region76
                $region81: #{tpu_custom_call.1} parent=66 // loop_exit
                  _
              $region67: #{tpu_custom_call.1} parent=51 // pred_fallthru
                _
            $region52: #{tpu_custom_call.1} parent=47 // pred_fallthru
              _
            // Predicated region
            $region53: #{tpu_custom_call.1} parent=47 // pred_check
              _
            $region54: #{tpu_custom_call.1} parent=47 // pred_check_branch
              %247 = sbr.rel (0) target = $region56
            $region55: #{tpu_custom_call.1} parent=47 // pred_region
              loop: start=0, step=1, limit=1
              $region57: #{tpu_custom_call.1} parent=55 // loop_pre_header
                _
              $region58: #{tpu_custom_call.1} parent=55 // loop_header
                %s250 = sphi 0, %s254
                %p251 = scmp.ge.s32.totalorder %s250, 1
                %s255 = sphi %s241, %s241
                %s256 = sphi %s239, %s239
              $region59: #{tpu_custom_call.1} parent=55 // loop_header_branch
                %253 = sbr.rel (%p251) target = $region63
              $region60: #{tpu_custom_call.1} parent=55 // loop_body
                %v257 = vld [vmem:[%s255] sm:$0xf]
                %258 = vst [vmem:[%s256] sm:$0xf] %v257
                %v259 = vld [vmem:[%s255 + $0xc] sm:$0xf]
                %260 = vst [vmem:[%s256 + $0x4] sm:$0xf] %v259
                %v261 = vld [vmem:[%s255 + $0x18] sm:$0xf]
                %262 = vst [vmem:[%s256 + $0x8] sm:$0xf] %v261
                %v263 = vld [vmem:[%s255 + $0x24] sm:$0xf]
                %264 = vst [vmem:[%s256 + $0xc] sm:$0xf] %v263
                %v265 = vld [vmem:[%s255 + $0x30] sm:$0xf]
                %266 = vst [vmem:[%s256 + $0x10] sm:$0xf] %v265
                %v267 = vld [vmem:[%s255 + $0x3c] sm:$0xf]
                %268 = vst [vmem:[%s256 + $0x14] sm:$0xf] %v267
                %v269 = vld [vmem:[%s255 + $0x48] sm:$0xf]
                %270 = vst [vmem:[%s256 + $0x18] sm:$0xf] %v269
                %v271 = vld [vmem:[%s255 + $0x54] sm:$0xf]
                %272 = vst [vmem:[%s256 + $0x1c] sm:$0xf] %v271
                %v273 = vld [vmem:[%s255 + $0x60] sm:$0xf]
                %274 = vst [vmem:[%s256 + $0x20] sm:$0xf] %v273
                %v275 = vld [vmem:[%s255 + $0x6c] sm:$0xf]
                %276 = vst [vmem:[%s256 + $0x24] sm:$0xf] %v275
                %v277 = vld [vmem:[%s255 + $0x78] sm:$0xf]
                %278 = vst [vmem:[%s256 + $0x28] sm:$0xf] %v277
                %v279 = vld [vmem:[%s255 + $0x84] sm:$0xf]
                %280 = vst [vmem:[%s256 + $0x2c] sm:$0xf] %v279
                %v281 = vld [vmem:[%s255 + $0x90] sm:$0xf]
                %282 = vst [vmem:[%s256 + $0x30] sm:$0xf] %v281
                %v283 = vld [vmem:[%s255 + $0x9c] sm:$0xf]
                %284 = vst [vmem:[%s256 + $0x34] sm:$0xf] %v283
                %v285 = vld [vmem:[%s255 + $0xa8] sm:$0xf]
                %286 = vst [vmem:[%s256 + $0x38] sm:$0xf] %v285
                %v287 = vld [vmem:[%s255 + $0xb4] sm:$0xf]
                %288 = vst [vmem:[%s256 + $0x3c] sm:$0xf] %v287
              $region61: #{tpu_custom_call.1} parent=55 // loop_footer
                %s254 = sadd.s32 1, %s250
              $region62: #{tpu_custom_call.1} parent=55 // loop_footer_branch
                %249 = sbr.rel target = $region58
              $region63: #{tpu_custom_call.1} parent=55 // loop_exit
                _
            $region56: #{tpu_custom_call.1} parent=47 // pred_fallthru
              _
          $region48: #{tpu_custom_call.1} parent=43 // pred_fallthru
            _
          %340 = vnop
        $region44: #{tpu_custom_call.1} parent=39 // pred_fallthru
          _
      $region40: #{tpu_custom_call.1} parent=5 // pred_fallthru
        _
      %p341 = scmp.le.s32.totalorder 1, %s18
      %p342 = scmp.lt.s32.totalorder %s18, 4
      %p343 = pnand %p341, %p342
      %p344 = pneg %p343
      // Predicated region
      $region82: #{tpu_custom_call.1} parent=5 // pred_check
        _
      $region83: #{tpu_custom_call.1} parent=5 // pred_check_branch
        %346 = sbr.rel (%p343) target = $region85
      $region84: #{tpu_custom_call.1} parent=5 // pred_region
        %s347 = ssub.s32 %s18, 1
        %s348 = sand.u32 %s31, 1
        %s349 = sand.u32 %s31, 1
        %s350 = smul.addr %s349, 64
        %s351 = scalar_lea.vmem [#allocation3], %s350
        // Predicated region
        $region86: #{tpu_custom_call.1} parent=84 // pred_check
          %p352 = pneg %p44
        $region87: #{tpu_custom_call.1} parent=84 // pred_check_branch
          %354 = sbr.rel (%p352) target = $region89
        $region88: #{tpu_custom_call.1} parent=84 // pred_region
          _
        $region89: #{tpu_custom_call.1} parent=84 // pred_fallthru
          _
        %s355 = sand.u32 %s31, 1
        %s356 = sand.u32 %s31, 1
        %s357 = smul.addr %s356, 64
        %s358 = scalar_lea.vmem [#allocation3], %s357
        %p359 = pneg %p44
        %p360 = pneg %p41
        %p361 = pneg %p65
        %p362 = pneg %p62
        %p363 = pneg %p86
        %p364 = pneg %p83
        %p365 = pneg %p107
        %p366 = pneg %p104
        %p367 = pneg %p128
        %p368 = pneg %p125
        %p369 = pneg %p149
        %p370 = pneg %p146
        %p371 = pneg %p170
        %p372 = pneg %p167
        %p373 = pneg %p196
        %p374 = pneg %p193
        %s375 = sand.u32 %s183, 1
        %s376 = scalar_lea.sflag [#allocation5], %s375
        %s377 = sand.u32 %s183, 1
        %s378 = scalar_lea.vmem [#allocation4], %s377
        %v380 = vld [vmem:[%s1] sm:$0xf]
        %v381 = vld [vmem:[%s1 + $0x4] sm:$0xf]
        %v382 = vld [vmem:[%s1 + $0x8] sm:$0xf]
        %v383 = vld [vmem:[%s1 + $0xc] sm:$0xf]
        %v384 = vld [vmem:[%s1 + $0x10] sm:$0xf]
        %v385 = vld [vmem:[%s1 + $0x14] sm:$0xf]
        %v386 = vld [vmem:[%s1 + $0x18] sm:$0xf]
        %v387 = vld [vmem:[%s1 + $0x1c] sm:$0xf]
        %v388 = vld [vmem:[%s1 + $0x20] sm:$0xf]
        %v389 = vld [vmem:[%s1 + $0x24] sm:$0xf]
        %v390 = vld [vmem:[%s1 + $0x28] sm:$0xf]
        %v391 = vld [vmem:[%s1 + $0x2c] sm:$0xf]
        %v392 = vld [vmem:[%s1 + $0x30] sm:$0xf]
        %v393 = vld [vmem:[%s1 + $0x34] sm:$0xf]
        %v394 = vld [vmem:[%s1 + $0x38] sm:$0xf]
        %v395 = vld [vmem:[%s1 + $0x3c] sm:$0xf]
        %v396 = vld [vmem:[%s351] sm:$0xf]
        %v397 = vld [vmem:[%s351 + $0x4] sm:$0xf]
        %v398 = vld [vmem:[%s351 + $0x8] sm:$0xf]
        %v399 = vld [vmem:[%s351 + $0xc] sm:$0xf]
        %v400 = vld [vmem:[%s351 + $0x10] sm:$0xf]
        %v401 = vld [vmem:[%s351 + $0x14] sm:$0xf]
        %v402 = vld [vmem:[%s351 + $0x18] sm:$0xf]
        %v403 = vld [vmem:[%s351 + $0x1c] sm:$0xf]
        %v404 = vld [vmem:[%s351 + $0x20] sm:$0xf]
        %v405 = vld [vmem:[%s351 + $0x24] sm:$0xf]
        %v406 = vld [vmem:[%s351 + $0x28] sm:$0xf]
        %v407 = vld [vmem:[%s351 + $0x2c] sm:$0xf]
        %v408 = vld [vmem:[%s351 + $0x30] sm:$0xf]
        %v409 = vld [vmem:[%s351 + $0x34] sm:$0xf]
        %v410 = vld [vmem:[%s351 + $0x38] sm:$0xf]
        %v411 = vld [vmem:[%s351 + $0x3c] sm:$0xf]
        %v412 = vld [vmem:[%s2] sm:$0xff]
        %v413 = vld [vmem:[%s2 + $0x8] sm:$0xff]
        %v414 = vld [vmem:[%s2 + $0x10] sm:$0xff]
        %v415 = vld [vmem:[%s2 + $0x18] sm:$0xff]
        %v416 = vld [vmem:[%s2 + $0x20] sm:$0xff]
        %v417 = vld [vmem:[%s2 + $0x28] sm:$0xff]
        %v418 = vld [vmem:[%s2 + $0x30] sm:$0xff]
        %v419 = vld [vmem:[%s2 + $0x38] sm:$0xff]
        %v420 = vld [vmem:[%s2 + $0x40] sm:$0xff]
        %v421 = vld [vmem:[%s2 + $0x48] sm:$0xff]
        %v422 = vld [vmem:[%s2 + $0x50] sm:$0xff]
        %v423 = vld [vmem:[%s2 + $0x58] sm:$0xff]
        %v424 = vld [vmem:[%s2 + $0x60] sm:$0xff]
        %v425 = vld [vmem:[%s2 + $0x68] sm:$0xff]
        %v426 = vld [vmem:[%s2 + $0x70] sm:$0xff]
        %v427 = vld [vmem:[%s2 + $0x78] sm:$0xff]
        %429 = vset.pattern.permute.xlu0 0
        %430 = vperm.xlu0 %429, %v412
        %v431 = vpop.permute.xlu0 %430
        %434 = vset.pattern.permute.xlu0 0
        %435 = vperm.xlu0 %434, %v413
        %v436 = vpop.permute.xlu0 %435
        %439 = vset.pattern.permute.xlu0 0
        %440 = vperm.xlu0 %439, %v414
        %v441 = vpop.permute.xlu0 %440
        %444 = vset.pattern.permute.xlu0 0
        %445 = vperm.xlu0 %444, %v415
        %v446 = vpop.permute.xlu0 %445
        %449 = vset.pattern.permute.xlu0 0
        %450 = vperm.xlu0 %449, %v416
        %v451 = vpop.permute.xlu0 %450
        %454 = vset.pattern.permute.xlu0 0
        %455 = vperm.xlu0 %454, %v417
        %v456 = vpop.permute.xlu0 %455
        %459 = vset.pattern.permute.xlu0 0
        %460 = vperm.xlu0 %459, %v418
        %v461 = vpop.permute.xlu0 %460
        %464 = vset.pattern.permute.xlu0 0
        %465 = vperm.xlu0 %464, %v419
        %v466 = vpop.permute.xlu0 %465
        %469 = vset.pattern.permute.xlu0 0
        %470 = vperm.xlu0 %469, %v420
        %v471 = vpop.permute.xlu0 %470
        %474 = vset.pattern.permute.xlu0 0
        %475 = vperm.xlu0 %474, %v421
        %v476 = vpop.permute.xlu0 %475
        %479 = vset.pattern.permute.xlu0 0
        %480 = vperm.xlu0 %479, %v422
        %v481 = vpop.permute.xlu0 %480
        %484 = vset.pattern.permute.xlu0 0
        %485 = vperm.xlu0 %484, %v423
        %v486 = vpop.permute.xlu0 %485
        %489 = vset.pattern.permute.xlu0 0
        %490 = vperm.xlu0 %489, %v424
        %v491 = vpop.permute.xlu0 %490
        %494 = vset.pattern.permute.xlu0 0
        %495 = vperm.xlu0 %494, %v425
        %v496 = vpop.permute.xlu0 %495
        %499 = vset.pattern.permute.xlu0 0
        %500 = vperm.xlu0 %499, %v426
        %v501 = vpop.permute.xlu0 %500
        %504 = vset.pattern.permute.xlu0 0
        %505 = vperm.xlu0 %504, %v427
        %v506 = vpop.permute.xlu0 %505
        %v524 = vunpack.c.l.b16 %v380
        %v525 = vunpack.c.l.b16 %v381
        %v526 = vunpack.c.l.b16 %v382
        %v527 = vunpack.c.l.b16 %v383
        %v528 = vunpack.c.l.b16 %v384
        %v529 = vunpack.c.l.b16 %v385
        %v530 = vunpack.c.l.b16 %v386
        %v531 = vunpack.c.l.b16 %v387
        %v532 = vunpack.c.l.b16 %v388
        %v533 = vunpack.c.l.b16 %v389
        %v534 = vunpack.c.l.b16 %v390
        %v535 = vunpack.c.l.b16 %v391
        %v536 = vunpack.c.l.b16 %v392
        %v537 = vunpack.c.l.b16 %v393
        %v538 = vunpack.c.l.b16 %v394
        %v539 = vunpack.c.l.b16 %v395
        %v540 = vpack.c.b16 %v525, %v524
        %v541 = vpack.c.b16 %v527, %v526
        %v542 = vpack.c.b16 %v529, %v528
        %v543 = vpack.c.b16 %v531, %v530
        %v544 = vpack.c.b16 %v533, %v532
        %v545 = vpack.c.b16 %v535, %v534
        %v546 = vpack.c.b16 %v537, %v536
        %v547 = vpack.c.b16 %v539, %v538
        %v572 = vunpack.c.l.b16 %v396
        %v573 = vunpack.c.l.b16 %v397
        %v574 = vunpack.c.l.b16 %v398
        %v575 = vunpack.c.l.b16 %v399
        %v576 = vunpack.c.l.b16 %v400
        %v577 = vunpack.c.l.b16 %v401
        %v578 = vunpack.c.l.b16 %v402
        %v579 = vunpack.c.l.b16 %v403
        %v580 = vunpack.c.l.b16 %v404
        %v581 = vunpack.c.l.b16 %v405
        %v582 = vunpack.c.l.b16 %v406
        %v583 = vunpack.c.l.b16 %v407
        %v584 = vunpack.c.l.b16 %v408
        %v585 = vunpack.c.l.b16 %v409
        %v586 = vunpack.c.l.b16 %v410
        %v587 = vunpack.c.l.b16 %v411
        %v588 = vpack.c.b16 %v573, %v572
        %v589 = vpack.c.b16 %v575, %v574
        %v590 = vpack.c.b16 %v577, %v576
        %v591 = vpack.c.b16 %v579, %v578
        %v592 = vpack.c.b16 %v581, %v580
        %v593 = vpack.c.b16 %v583, %v582
        %v594 = vpack.c.b16 %v585, %v584
        %v595 = vpack.c.b16 %v587, %v586
        %604 = vmatprep.subr.bf16.mxu0 0
        %605 = vmatpush1.bf16.msra.mxu0 %v588
        %606 = vmatprep.subr.bf16.mxu0 0
        %607 = vmatpush1.bf16.msra.mxu0 %v589
        %608 = vmatprep.subr.bf16.mxu0 0
        %609 = vmatpush1.bf16.msra.mxu0 %v590
        %610 = vmatprep.subr.bf16.mxu0 0
        %611 = vmatpush1.bf16.msra.mxu0 %v591
        %612 = vmatprep.subr.bf16.mxu0 0
        %613 = vmatpush1.bf16.msra.mxu0 %v592
        %614 = vmatprep.subr.bf16.mxu0 0
        %615 = vmatpush1.bf16.msra.mxu0 %v593
        %616 = vmatprep.subr.bf16.mxu0 0
        %617 = vmatpush1.bf16.msra.mxu0 %v594
        %618 = vmatprep.subr.bf16.mxu0 0
        %619 = vmatpush1.bf16.msra.mxu0 %v595
        %620 = vmatprep.subr.bf16.mxu0 0
        %621 = vmatpush1.bf16.msra.mxu0 0
        %622 = vmatprep.subr.bf16.mxu0 0
        %623 = vmatpush1.bf16.msra.mxu0 0
        %624 = vmatprep.subr.bf16.mxu0 0
        %625 = vmatpush1.bf16.msra.mxu0 0
        %626 = vmatprep.subr.bf16.mxu0 0
        %627 = vmatpush1.bf16.msra.mxu0 0
        %628 = vmatprep.subr.bf16.mxu0 0
        %629 = vmatpush1.bf16.msra.mxu0 0
        %630 = vmatprep.subr.bf16.mxu0 0
        %631 = vmatpush1.bf16.msra.mxu0 0
        %632 = vmatprep.subr.bf16.mxu0 0
        %633 = vmatpush1.bf16.msra.mxu0 0
        %634 = vmatprep.subr.bf16.mxu0 0
        %635 = vmatpush1.bf16.msra.mxu0 0
        %636 = vmatprep.mubr.bf16.mxu0 0
        %637 = vmatmul.mubr.bf16.gmra.mrb[0].mxu0 %v540
        %v638 = vpop.f32.mrb[0].mxu0
        %v639 = vadd.f32 %v431, %v638
        %v640 = vpop.f32.mrb[0].mxu0
        %v641 = vpop.f32.mrb[0].mxu0
        %v642 = vadd.f32 %v436, %v641
        %v643 = vpop.f32.mrb[0].mxu0
        %644 = vmatprep.mubr.bf16.mxu0 0
        %645 = vmatmul.mubr.bf16.gmra.mrb[0].mxu0 %v541
        %v646 = vpop.f32.mrb[0].mxu0
        %v647 = vadd.f32 %v441, %v646
        %v648 = vpop.f32.mrb[0].mxu0
        %v649 = vpop.f32.mrb[0].mxu0
        %v650 = vadd.f32 %v446, %v649
        %v651 = vpop.f32.mrb[0].mxu0
        %652 = vmatprep.mubr.bf16.mxu0 0
        %653 = vmatmul.mubr.bf16.gmra.mrb[0].mxu0 %v542
        %v654 = vpop.f32.mrb[0].mxu0
        %v655 = vadd.f32 %v451, %v654
        %v656 = vpop.f32.mrb[0].mxu0
        %v657 = vpop.f32.mrb[0].mxu0
        %v658 = vadd.f32 %v456, %v657
        %v659 = vpop.f32.mrb[0].mxu0
        %660 = vmatprep.mubr.bf16.mxu0 0
        %661 = vmatmul.mubr.bf16.gmra.mrb[0].mxu0 %v543
        %v662 = vpop.f32.mrb[0].mxu0
        %v663 = vadd.f32 %v461, %v662
        %v664 = vpop.f32.mrb[0].mxu0
        %v665 = vpop.f32.mrb[0].mxu0
        %v666 = vadd.f32 %v466, %v665
        %v667 = vpop.f32.mrb[0].mxu0
        %668 = vmatprep.mubr.bf16.mxu0 0
        %669 = vmatmul.mubr.bf16.gmra.mrb[0].mxu0 %v544
        %v670 = vpop.f32.mrb[0].mxu0
        %v671 = vadd.f32 %v471, %v670
        %v672 = vpop.f32.mrb[0].mxu0
        %v673 = vpop.f32.mrb[0].mxu0
        %v674 = vadd.f32 %v476, %v673
        %v675 = vpop.f32.mrb[0].mxu0
        %676 = vmatprep.mubr.bf16.mxu0 0
        %677 = vmatmul.mubr.bf16.gmra.mrb[0].mxu0 %v545
        %v678 = vpop.f32.mrb[0].mxu0
        %v679 = vadd.f32 %v481, %v678
        %v680 = vpop.f32.mrb[0].mxu0
        %v681 = vpop.f32.mrb[0].mxu0
        %v682 = vadd.f32 %v486, %v681
        %v683 = vpop.f32.mrb[0].mxu0
        %684 = vmatprep.mubr.bf16.mxu0 0
        %685 = vmatmul.mubr.bf16.gmra.mrb[0].mxu0 %v546
        %v686 = vpop.f32.mrb[0].mxu0
        %v687 = vadd.f32 %v491, %v686
        %v688 = vpop.f32.mrb[0].mxu0
        %v689 = vpop.f32.mrb[0].mxu0
        %v690 = vadd.f32 %v496, %v689
        %v691 = vpop.f32.mrb[0].mxu0
        %692 = vmatprep.mubr.bf16.mxu0 0
        %693 = vmatmul.mubr.bf16.gmra.mrb[0].mxu0 %v547
        %v694 = vpop.f32.mrb[0].mxu0
        %v695 = vadd.f32 %v501, %v694
        %v696 = vpop.f32.mrb[0].mxu0
        %v697 = vpop.f32.mrb[0].mxu0
        %v698 = vadd.f32 %v506, %v697
        %v699 = vpop.f32.mrb[0].mxu0
        %700 = vdwg.mxu0
        %v701 = vmax.f32 %v639, 0.0
        %v702 = vmax.f32 %v642, 0.0
        %v703 = vmax.f32 %v647, 0.0
        %v704 = vmax.f32 %v650, 0.0
        %v705 = vmax.f32 %v655, 0.0
        %v706 = vmax.f32 %v658, 0.0
        %v707 = vmax.f32 %v663, 0.0
        %v708 = vmax.f32 %v666, 0.0
        %v709 = vmax.f32 %v671, 0.0
        %v710 = vmax.f32 %v674, 0.0
        %v711 = vmax.f32 %v679, 0.0
        %v712 = vmax.f32 %v682, 0.0
        %v713 = vmax.f32 %v687, 0.0
        %v714 = vmax.f32 %v690, 0.0
        %v715 = vmax.f32 %v695, 0.0
        %v716 = vmax.f32 %v698, 0.0
        %v717 = vld [vmem:[%s3] sm:$0xf]
        %v718 = vld [vmem:[%s3 + $0x4] sm:$0xf]
        %v719 = vld [vmem:[%s3 + $0x8] sm:$0xf]
        %v720 = vld [vmem:[%s3 + $0xc] sm:$0xf]
        %v721 = vld [vmem:[%s3 + $0x10] sm:$0xf]
        %v722 = vld [vmem:[%s3 + $0x14] sm:$0xf]
        %v723 = vld [vmem:[%s3 + $0x18] sm:$0xf]
        %v724 = vld [vmem:[%s3 + $0x1c] sm:$0xf]
        %v725 = vld [vmem:[%s3 + $0x20] sm:$0xf]
        %v726 = vld [vmem:[%s3 + $0x24] sm:$0xf]
        %v727 = vld [vmem:[%s3 + $0x28] sm:$0xf]
        %v728 = vld [vmem:[%s3 + $0x2c] sm:$0xf]
        %v729 = vld [vmem:[%s3 + $0x30] sm:$0xf]
        %v730 = vld [vmem:[%s3 + $0x34] sm:$0xf]
        %v731 = vld [vmem:[%s3 + $0x38] sm:$0xf]
        %v732 = vld [vmem:[%s3 + $0x3c] sm:$0xf]
        %v733 = vpack.c.bf16 %v702, %v701
        %v734 = vpack.c.bf16 %v704, %v703
        %v735 = vpack.c.bf16 %v706, %v705
        %v736 = vpack.c.bf16 %v708, %v707
        %v737 = vpack.c.bf16 %v710, %v709
        %v738 = vpack.c.bf16 %v712, %v711
        %v739 = vpack.c.bf16 %v714, %v713
        %v740 = vpack.c.bf16 %v716, %v715
        %v741 = vld [vmem:[%s4] sm:$0xff]
        %v742 = vld [vmem:[%s4 + $0x8] sm:$0xff]
        %v743 = vld [vmem:[%s4 + $0x10] sm:$0xff]
        %v744 = vld [vmem:[%s4 + $0x18] sm:$0xff]
        %v745 = vld [vmem:[%s4 + $0x20] sm:$0xff]
        %v746 = vld [vmem:[%s4 + $0x28] sm:$0xff]
        %v747 = vld [vmem:[%s4 + $0x30] sm:$0xff]
        %v748 = vld [vmem:[%s4 + $0x38] sm:$0xff]
        %v749 = vld [vmem:[%s4 + $0x40] sm:$0xff]
        %v750 = vld [vmem:[%s4 + $0x48] sm:$0xff]
        %v751 = vld [vmem:[%s4 + $0x50] sm:$0xff]
        %v752 = vld [vmem:[%s4 + $0x58] sm:$0xff]
        %v753 = vld [vmem:[%s4 + $0x60] sm:$0xff]
        %v754 = vld [vmem:[%s4 + $0x68] sm:$0xff]
        %v755 = vld [vmem:[%s4 + $0x70] sm:$0xff]
        %v756 = vld [vmem:[%s4 + $0x78] sm:$0xff]
        %758 = vset.pattern.permute.xlu0 0
        %759 = vperm.xlu0 %758, %v741
        %v760 = vpop.permute.xlu0 %759
        %763 = vset.pattern.permute.xlu0 0
        %764 = vperm.xlu0 %763, %v742
        %v765 = vpop.permute.xlu0 %764
        %768 = vset.pattern.permute.xlu0 0
        %769 = vperm.xlu0 %768, %v743
        %v770 = vpop.permute.xlu0 %769
        %773 = vset.pattern.permute.xlu0 0
        %774 = vperm.xlu0 %773, %v744
        %v775 = vpop.permute.xlu0 %774
        %778 = vset.pattern.permute.xlu0 0
        %779 = vperm.xlu0 %778, %v745
        %v780 = vpop.permute.xlu0 %779
        %783 = vset.pattern.permute.xlu0 0
        %784 = vperm.xlu0 %783, %v746
        %v785 = vpop.permute.xlu0 %784
        %788 = vset.pattern.permute.xlu0 0
        %789 = vperm.xlu0 %788, %v747
        %v790 = vpop.permute.xlu0 %789
        %793 = vset.pattern.permute.xlu0 0
        %794 = vperm.xlu0 %793, %v748
        %v795 = vpop.permute.xlu0 %794
        %798 = vset.pattern.permute.xlu0 0
        %799 = vperm.xlu0 %798, %v749
        %v800 = vpop.permute.xlu0 %799
        %803 = vset.pattern.permute.xlu0 0
        %804 = vperm.xlu0 %803, %v750
        %v805 = vpop.permute.xlu0 %804
        %808 = vset.pattern.permute.xlu0 0
        %809 = vperm.xlu0 %808, %v751
        %v810 = vpop.permute.xlu0 %809
        %813 = vset.pattern.permute.xlu0 0
        %814 = vperm.xlu0 %813, %v752
        %v815 = vpop.permute.xlu0 %814
        %818 = vset.pattern.permute.xlu0 0
        %819 = vperm.xlu0 %818, %v753
        %v820 = vpop.permute.xlu0 %819
        %823 = vset.pattern.permute.xlu0 0
        %824 = vperm.xlu0 %823, %v754
        %v825 = vpop.permute.xlu0 %824
        %828 = vset.pattern.permute.xlu0 0
        %829 = vperm.xlu0 %828, %v755
        %v830 = vpop.permute.xlu0 %829
        %833 = vset.pattern.permute.xlu0 0
        %834 = vperm.xlu0 %833, %v756
        %v835 = vpop.permute.xlu0 %834
        %v853 = vunpack.c.l.b16 %v717
        %v854 = vunpack.c.l.b16 %v718
        %v855 = vunpack.c.l.b16 %v719
        %v856 = vunpack.c.l.b16 %v720
        %v857 = vunpack.c.l.b16 %v721
        %v858 = vunpack.c.l.b16 %v722
        %v859 = vunpack.c.l.b16 %v723
        %v860 = vunpack.c.l.b16 %v724
        %v861 = vunpack.c.l.b16 %v725
        %v862 = vunpack.c.l.b16 %v726
        %v863 = vunpack.c.l.b16 %v727
        %v864 = vunpack.c.l.b16 %v728
        %v865 = vunpack.c.l.b16 %v729
        %v866 = vunpack.c.l.b16 %v730
        %v867 = vunpack.c.l.b16 %v731
        %v868 = vunpack.c.l.b16 %v732
        %v869 = vpack.c.b16 %v854, %v853
        %v870 = vpack.c.b16 %v856, %v855
        %v871 = vpack.c.b16 %v858, %v857
        %v872 = vpack.c.b16 %v860, %v859
        %v873 = vpack.c.b16 %v862, %v861
        %v874 = vpack.c.b16 %v864, %v863
        %v875 = vpack.c.b16 %v866, %v865
        %v876 = vpack.c.b16 %v868, %v867
        %885 = vmatprep.subr.bf16.mxu0 0
        %886 = vmatpush1.bf16.msra.mxu0 %v733
        %887 = vmatprep.subr.bf16.mxu0 0
        %888 = vmatpush1.bf16.msra.mxu0 %v734
        %889 = vmatprep.subr.bf16.mxu0 0
        %890 = vmatpush1.bf16.msra.mxu0 %v735
        %891 = vmatprep.subr.bf16.mxu0 0
        %892 = vmatpush1.bf16.msra.mxu0 %v736
        %893 = vmatprep.subr.bf16.mxu0 0
        %894 = vmatpush1.bf16.msra.mxu0 %v737
        %895 = vmatprep.subr.bf16.mxu0 0
        %896 = vmatpush1.bf16.msra.mxu0 %v738
        %897 = vmatprep.subr.bf16.mxu0 0
        %898 = vmatpush1.bf16.msra.mxu0 %v739
        %899 = vmatprep.subr.bf16.mxu0 0
        %900 = vmatpush1.bf16.msra.mxu0 %v740
        %901 = vmatprep.subr.bf16.mxu0 0
        %902 = vmatpush1.bf16.msra.mxu0 0
        %903 = vmatprep.subr.bf16.mxu0 0
        %904 = vmatpush1.bf16.msra.mxu0 0
        %905 = vmatprep.subr.bf16.mxu0 0
        %906 = vmatpush1.bf16.msra.mxu0 0
        %907 = vmatprep.subr.bf16.mxu0 0
        %908 = vmatpush1.bf16.msra.mxu0 0
        %909 = vmatprep.subr.bf16.mxu0 0
        %910 = vmatpush1.bf16.msra.mxu0 0
        %911 = vmatprep.subr.bf16.mxu0 0
        %912 = vmatpush1.bf16.msra.mxu0 0
        %913 = vmatprep.subr.bf16.mxu0 0
        %914 = vmatpush1.bf16.msra.mxu0 0
        %915 = vmatprep.subr.bf16.mxu0 0
        %916 = vmatpush1.bf16.msra.mxu0 0
        %917 = vmatprep.mubr.bf16.mxu0 0
        %918 = vmatmul.mubr.bf16.gmra.mrb[0].mxu0 %v869
        %v919 = vpop.f32.mrb[0].mxu0
        %v920 = vadd.f32 %v760, %v919
        %v921 = vpop.f32.mrb[0].mxu0
        %v922 = vpop.f32.mrb[0].mxu0
        %v923 = vadd.f32 %v765, %v922
        %v924 = vpop.f32.mrb[0].mxu0
        %925 = vmatprep.mubr.bf16.mxu0 0
        %926 = vmatmul.mubr.bf16.gmra.mrb[0].mxu0 %v870
        %v927 = vpop.f32.mrb[0].mxu0
        %v928 = vadd.f32 %v770, %v927
        %v929 = vpop.f32.mrb[0].mxu0
        %v930 = vpop.f32.mrb[0].mxu0
        %v931 = vadd.f32 %v775, %v930
        %v932 = vpop.f32.mrb[0].mxu0
        %933 = vmatprep.mubr.bf16.mxu0 0
        %934 = vmatmul.mubr.bf16.gmra.mrb[0].mxu0 %v871
        %v935 = vpop.f32.mrb[0].mxu0
        %v936 = vadd.f32 %v780, %v935
        %v937 = vpop.f32.mrb[0].mxu0
        %v938 = vpop.f32.mrb[0].mxu0
        %v939 = vadd.f32 %v785, %v938
        %v940 = vpop.f32.mrb[0].mxu0
        %941 = vmatprep.mubr.bf16.mxu0 0
        %942 = vmatmul.mubr.bf16.gmra.mrb[0].mxu0 %v872
        %v943 = vpop.f32.mrb[0].mxu0
        %v944 = vadd.f32 %v790, %v943
        %v945 = vpop.f32.mrb[0].mxu0
        %v946 = vpop.f32.mrb[0].mxu0
        %v947 = vadd.f32 %v795, %v946
        %v948 = vpop.f32.mrb[0].mxu0
        %949 = vmatprep.mubr.bf16.mxu0 0
        %950 = vmatmul.mubr.bf16.gmra.mrb[0].mxu0 %v873
        %v951 = vpop.f32.mrb[0].mxu0
        %v952 = vadd.f32 %v800, %v951
        %v953 = vpop.f32.mrb[0].mxu0
        %v954 = vpop.f32.mrb[0].mxu0
        %v955 = vadd.f32 %v805, %v954
        %v956 = vpop.f32.mrb[0].mxu0
        %957 = vmatprep.mubr.bf16.mxu0 0
        %958 = vmatmul.mubr.bf16.gmra.mrb[0].mxu0 %v874
        %v959 = vpop.f32.mrb[0].mxu0
        %v960 = vadd.f32 %v810, %v959
        %v961 = vpop.f32.mrb[0].mxu0
        %v962 = vpop.f32.mrb[0].mxu0
        %v963 = vadd.f32 %v815, %v962
        %v964 = vpop.f32.mrb[0].mxu0
        %965 = vmatprep.mubr.bf16.mxu0 0
        %966 = vmatmul.mubr.bf16.gmra.mrb[0].mxu0 %v875
        %v967 = vpop.f32.mrb[0].mxu0
        %v968 = vadd.f32 %v820, %v967
        %v969 = vpop.f32.mrb[0].mxu0
        %v970 = vpop.f32.mrb[0].mxu0
        %v971 = vadd.f32 %v825, %v970
        %v972 = vpop.f32.mrb[0].mxu0
        %973 = vmatprep.mubr.bf16.mxu0 0
        %974 = vmatmul.mubr.bf16.gmra.mrb[0].mxu0 %v876
        %v975 = vpop.f32.mrb[0].mxu0
        %v976 = vadd.f32 %v830, %v975
        %v977 = vpop.f32.mrb[0].mxu0
        %v978 = vpop.f32.mrb[0].mxu0
        %v979 = vadd.f32 %v835, %v978
        %v980 = vpop.f32.mrb[0].mxu0
        %981 = vdwg.mxu0
        %v982 = vmax.f32 %v920, 0.0
        %v983 = vmax.f32 %v923, 0.0
        %v984 = vmax.f32 %v928, 0.0
        %v985 = vmax.f32 %v931, 0.0
        %v986 = vmax.f32 %v936, 0.0
        %v987 = vmax.f32 %v939, 0.0
        %v988 = vmax.f32 %v944, 0.0
        %v989 = vmax.f32 %v947, 0.0
        %v990 = vmax.f32 %v952, 0.0
        %v991 = vmax.f32 %v955, 0.0
        %v992 = vmax.f32 %v960, 0.0
        %v993 = vmax.f32 %v963, 0.0
        %v994 = vmax.f32 %v968, 0.0
        %v995 = vmax.f32 %v971, 0.0
        %v996 = vmax.f32 %v976, 0.0
        %v997 = vmax.f32 %v979, 0.0
        %s998 = scalar_lea.vmem %s3, 64
        %v999 = vld [vmem:[%s998] sm:$0xf]
        %v1000 = vld [vmem:[%s998 + $0x4] sm:$0xf]
        %v1001 = vld [vmem:[%s998 + $0x8] sm:$0xf]
        %v1002 = vld [vmem:[%s998 + $0xc] sm:$0xf]
        %v1003 = vld [vmem:[%s998 + $0x10] sm:$0xf]
        %v1004 = vld [vmem:[%s998 + $0x14] sm:$0xf]
        %v1005 = vld [vmem:[%s998 + $0x18] sm:$0xf]
        %v1006 = vld [vmem:[%s998 + $0x1c] sm:$0xf]
        %v1007 = vld [vmem:[%s998 + $0x20] sm:$0xf]
        %v1008 = vld [vmem:[%s998 + $0x24] sm:$0xf]
        %v1009 = vld [vmem:[%s998 + $0x28] sm:$0xf]
        %v1010 = vld [vmem:[%s998 + $0x2c] sm:$0xf]
        %v1011 = vld [vmem:[%s998 + $0x30] sm:$0xf]
        %v1012 = vld [vmem:[%s998 + $0x34] sm:$0xf]
        %v1013 = vld [vmem:[%s998 + $0x38] sm:$0xf]
        %v1014 = vld [vmem:[%s998 + $0x3c] sm:$0xf]
        %v1015 = vpack.c.bf16 %v983, %v982
        %v1016 = vpack.c.bf16 %v985, %v984
        %v1017 = vpack.c.bf16 %v987, %v986
        %v1018 = vpack.c.bf16 %v989, %v988
        %v1019 = vpack.c.bf16 %v991, %v990
        %v1020 = vpack.c.bf16 %v993, %v992
        %v1021 = vpack.c.bf16 %v995, %v994
        %v1022 = vpack.c.bf16 %v997, %v996
        %s1023 = scalar_lea.vmem %s4, 128
        %v1024 = vld [vmem:[%s1023] sm:$0xff]
        %v1025 = vld [vmem:[%s1023 + $0x8] sm:$0xff]
        %v1026 = vld [vmem:[%s1023 + $0x10] sm:$0xff]
        %v1027 = vld [vmem:[%s1023 + $0x18] sm:$0xff]
        %v1028 = vld [vmem:[%s1023 + $0x20] sm:$0xff]
        %v1029 = vld [vmem:[%s1023 + $0x28] sm:$0xff]
        %v1030 = vld [vmem:[%s1023 + $0x30] sm:$0xff]
        %v1031 = vld [vmem:[%s1023 + $0x38] sm:$0xff]
        %v1032 = vld [vmem:[%s1023 + $0x40] sm:$0xff]
        %v1033 = vld [vmem:[%s1023 + $0x48] sm:$0xff]
        %v1034 = vld [vmem:[%s1023 + $0x50] sm:$0xff]
        %v1035 = vld [vmem:[%s1023 + $0x58] sm:$0xff]
        %v1036 = vld [vmem:[%s1023 + $0x60] sm:$0xff]
        %v1037 = vld [vmem:[%s1023 + $0x68] sm:$0xff]
        %v1038 = vld [vmem:[%s1023 + $0x70] sm:$0xff]
        %v1039 = vld [vmem:[%s1023 + $0x78] sm:$0xff]
        %1041 = vset.pattern.permute.xlu0 0
        %1042 = vperm.xlu0 %1041, %v1024
        %v1043 = vpop.permute.xlu0 %1042
        %1046 = vset.pattern.permute.xlu0 0
        %1047 = vperm.xlu0 %1046, %v1025
        %v1048 = vpop.permute.xlu0 %1047
        %1051 = vset.pattern.permute.xlu0 0
        %1052 = vperm.xlu0 %1051, %v1026
        %v1053 = vpop.permute.xlu0 %1052
        %1056 = vset.pattern.permute.xlu0 0
        %1057 = vperm.xlu0 %1056, %v1027
        %v1058 = vpop.permute.xlu0 %1057
        %1061 = vset.pattern.permute.xlu0 0
        %1062 = vperm.xlu0 %1061, %v1028
        %v1063 = vpop.permute.xlu0 %1062
        %1066 = vset.pattern.permute.xlu0 0
        %1067 = vperm.xlu0 %1066, %v1029
        %v1068 = vpop.permute.xlu0 %1067
        %1071 = vset.pattern.permute.xlu0 0
        %1072 = vperm.xlu0 %1071, %v1030
        %v1073 = vpop.permute.xlu0 %1072
        %1076 = vset.pattern.permute.xlu0 0
        %1077 = vperm.xlu0 %1076, %v1031
        %v1078 = vpop.permute.xlu0 %1077
        %1081 = vset.pattern.permute.xlu0 0
        %1082 = vperm.xlu0 %1081, %v1032
        %v1083 = vpop.permute.xlu0 %1082
        %1086 = vset.pattern.permute.xlu0 0
        %1087 = vperm.xlu0 %1086, %v1033
        %v1088 = vpop.permute.xlu0 %1087
        %1091 = vset.pattern.permute.xlu0 0
        %1092 = vperm.xlu0 %1091, %v1034
        %v1093 = vpop.permute.xlu0 %1092
        %1096 = vset.pattern.permute.xlu0 0
        %1097 = vperm.xlu0 %1096, %v1035
        %v1098 = vpop.permute.xlu0 %1097
        %1101 = vset.pattern.permute.xlu0 0
        %1102 = vperm.xlu0 %1101, %v1036
        %v1103 = vpop.permute.xlu0 %1102
        %1106 = vset.pattern.permute.xlu0 0
        %1107 = vperm.xlu0 %1106, %v1037
        %v1108 = vpop.permute.xlu0 %1107
        %1111 = vset.pattern.permute.xlu0 0
        %1112 = vperm.xlu0 %1111, %v1038
        %v1113 = vpop.permute.xlu0 %1112
        %1116 = vset.pattern.permute.xlu0 0
        %1117 = vperm.xlu0 %1116, %v1039
        %v1118 = vpop.permute.xlu0 %1117
        %v1136 = vunpack.c.l.b16 %v999
        %v1137 = vunpack.c.l.b16 %v1000
        %v1138 = vunpack.c.l.b16 %v1001
        %v1139 = vunpack.c.l.b16 %v1002
        %v1140 = vunpack.c.l.b16 %v1003
        %v1141 = vunpack.c.l.b16 %v1004
        %v1142 = vunpack.c.l.b16 %v1005
        %v1143 = vunpack.c.l.b16 %v1006
        %v1144 = vunpack.c.l.b16 %v1007
        %v1145 = vunpack.c.l.b16 %v1008
        %v1146 = vunpack.c.l.b16 %v1009
        %v1147 = vunpack.c.l.b16 %v1010
        %v1148 = vunpack.c.l.b16 %v1011
        %v1149 = vunpack.c.l.b16 %v1012
        %v1150 = vunpack.c.l.b16 %v1013
        %v1151 = vunpack.c.l.b16 %v1014
        %v1152 = vpack.c.b16 %v1137, %v1136
        %v1153 = vpack.c.b16 %v1139, %v1138
        %v1154 = vpack.c.b16 %v1141, %v1140
        %v1155 = vpack.c.b16 %v1143, %v1142
        %v1156 = vpack.c.b16 %v1145, %v1144
        %v1157 = vpack.c.b16 %v1147, %v1146
        %v1158 = vpack.c.b16 %v1149, %v1148
        %v1159 = vpack.c.b16 %v1151, %v1150
        %1168 = vmatprep.subr.bf16.mxu0 0
        %1169 = vmatpush1.bf16.msra.mxu0 %v1015
        %1170 = vmatprep.subr.bf16.mxu0 0
        %1171 = vmatpush1.bf16.msra.mxu0 %v1016
        %1172 = vmatprep.subr.bf16.mxu0 0
        %1173 = vmatpush1.bf16.msra.mxu0 %v1017
        %1174 = vmatprep.subr.bf16.mxu0 0
        %1175 = vmatpush1.bf16.msra.mxu0 %v1018
        %1176 = vmatprep.subr.bf16.mxu0 0
        %1177 = vmatpush1.bf16.msra.mxu0 %v1019
        %1178 = vmatprep.subr.bf16.mxu0 0
        %1179 = vmatpush1.bf16.msra.mxu0 %v1020
        %1180 = vmatprep.subr.bf16.mxu0 0
        %1181 = vmatpush1.bf16.msra.mxu0 %v1021
        %1182 = vmatprep.subr.bf16.mxu0 0
        %1183 = vmatpush1.bf16.msra.mxu0 %v1022
        %1184 = vmatprep.subr.bf16.mxu0 0
        %1185 = vmatpush1.bf16.msra.mxu0 0
        %1186 = vmatprep.subr.bf16.mxu0 0
        %1187 = vmatpush1.bf16.msra.mxu0 0
        %1188 = vmatprep.subr.bf16.mxu0 0
        %1189 = vmatpush1.bf16.msra.mxu0 0
        %1190 = vmatprep.subr.bf16.mxu0 0
        %1191 = vmatpush1.bf16.msra.mxu0 0
        %1192 = vmatprep.subr.bf16.mxu0 0
        %1193 = vmatpush1.bf16.msra.mxu0 0
        %1194 = vmatprep.subr.bf16.mxu0 0
        %1195 = vmatpush1.bf16.msra.mxu0 0
        %1196 = vmatprep.subr.bf16.mxu0 0
        %1197 = vmatpush1.bf16.msra.mxu0 0
        %1198 = vmatprep.subr.bf16.mxu0 0
        %1199 = vmatpush1.bf16.msra.mxu0 0
        %1200 = vmatprep.mubr.bf16.mxu0 0
        %1201 = vmatmul.mubr.bf16.gmra.mrb[0].mxu0 %v1152
        %v1202 = vpop.f32.mrb[0].mxu0
        %v1203 = vadd.f32 %v1043, %v1202
        %v1204 = vpop.f32.mrb[0].mxu0
        %v1205 = vpop.f32.mrb[0].mxu0
        %v1206 = vadd.f32 %v1048, %v1205
        %v1207 = vpop.f32.mrb[0].mxu0
        %1208 = vmatprep.mubr.bf16.mxu0 0
        %1209 = vmatmul.mubr.bf16.gmra.mrb[0].mxu0 %v1153
        %v1210 = vpop.f32.mrb[0].mxu0
        %v1211 = vadd.f32 %v1053, %v1210
        %v1212 = vpop.f32.mrb[0].mxu0
        %v1213 = vpop.f32.mrb[0].mxu0
        %v1214 = vadd.f32 %v1058, %v1213
        %v1215 = vpop.f32.mrb[0].mxu0
        %1216 = vmatprep.mubr.bf16.mxu0 0
        %1217 = vmatmul.mubr.bf16.gmra.mrb[0].mxu0 %v1154
        %v1218 = vpop.f32.mrb[0].mxu0
        %v1219 = vadd.f32 %v1063, %v1218
        %v1220 = vpop.f32.mrb[0].mxu0
        %v1221 = vpop.f32.mrb[0].mxu0
        %v1222 = vadd.f32 %v1068, %v1221
        %v1223 = vpop.f32.mrb[0].mxu0
        %1224 = vmatprep.mubr.bf16.mxu0 0
        %1225 = vmatmul.mubr.bf16.gmra.mrb[0].mxu0 %v1155
        %v1226 = vpop.f32.mrb[0].mxu0
        %v1227 = vadd.f32 %v1073, %v1226
        %v1228 = vpop.f32.mrb[0].mxu0
        %v1229 = vpop.f32.mrb[0].mxu0
        %v1230 = vadd.f32 %v1078, %v1229
        %v1231 = vpop.f32.mrb[0].mxu0
        %1232 = vmatprep.mubr.bf16.mxu0 0
        %1233 = vmatmul.mubr.bf16.gmra.mrb[0].mxu0 %v1156
        %v1234 = vpop.f32.mrb[0].mxu0
        %v1235 = vadd.f32 %v1083, %v1234
        %v1236 = vpop.f32.mrb[0].mxu0
        %v1237 = vpop.f32.mrb[0].mxu0
        %v1238 = vadd.f32 %v1088, %v1237
        %v1239 = vpop.f32.mrb[0].mxu0
        %1240 = vmatprep.mubr.bf16.mxu0 0
        %1241 = vmatmul.mubr.bf16.gmra.mrb[0].mxu0 %v1157
        %v1242 = vpop.f32.mrb[0].mxu0
        %v1243 = vadd.f32 %v1093, %v1242
        %v1244 = vpop.f32.mrb[0].mxu0
        %v1245 = vpop.f32.mrb[0].mxu0
        %v1246 = vadd.f32 %v1098, %v1245
        %v1247 = vpop.f32.mrb[0].mxu0
        %1248 = vmatprep.mubr.bf16.mxu0 0
        %1249 = vmatmul.mubr.bf16.gmra.mrb[0].mxu0 %v1158
        %v1250 = vpop.f32.mrb[0].mxu0
        %v1251 = vadd.f32 %v1103, %v1250
        %v1252 = vpop.f32.mrb[0].mxu0
        %v1253 = vpop.f32.mrb[0].mxu0
        %v1254 = vadd.f32 %v1108, %v1253
        %v1255 = vpop.f32.mrb[0].mxu0
        %1256 = vmatprep.mubr.bf16.mxu0 0
        %1257 = vmatmul.mubr.bf16.gmra.mrb[0].mxu0 %v1159
        %v1258 = vpop.f32.mrb[0].mxu0
        %v1259 = vadd.f32 %v1113, %v1258
        %v1260 = vpop.f32.mrb[0].mxu0
        %v1261 = vpop.f32.mrb[0].mxu0
        %v1262 = vadd.f32 %v1118, %v1261
        %v1263 = vpop.f32.mrb[0].mxu0
        %1264 = vdwg.mxu0
        %v1265 = vmax.f32 %v1203, 0.0
        %v1266 = vmax.f32 %v1206, 0.0
        %v1267 = vmax.f32 %v1211, 0.0
        %v1268 = vmax.f32 %v1214, 0.0
        %v1269 = vmax.f32 %v1219, 0.0
        %v1270 = vmax.f32 %v1222, 0.0
        %v1271 = vmax.f32 %v1227, 0.0
        %v1272 = vmax.f32 %v1230, 0.0
        %v1273 = vmax.f32 %v1235, 0.0
        %v1274 = vmax.f32 %v1238, 0.0
        %v1275 = vmax.f32 %v1243, 0.0
        %v1276 = vmax.f32 %v1246, 0.0
        %v1277 = vmax.f32 %v1251, 0.0
        %v1278 = vmax.f32 %v1254, 0.0
        %v1279 = vmax.f32 %v1259, 0.0
        %v1280 = vmax.f32 %v1262, 0.0
        %v1281 = vld [vmem:[%s5] sm:$0xff]
        %v1282 = vld [vmem:[%s5 + $0x8] sm:$0xff]
        %v1283 = vld [vmem:[%s5 + $0x10] sm:$0xff]
        %v1284 = vld [vmem:[%s5 + $0x18] sm:$0xff]
        %v1285 = vld [vmem:[%s5 + $0x20] sm:$0xff]
        %v1286 = vld [vmem:[%s5 + $0x28] sm:$0xff]
        %v1287 = vld [vmem:[%s5 + $0x30] sm:$0xff]
        %v1288 = vld [vmem:[%s5 + $0x38] sm:$0xff]
        %v1289 = vld [vmem:[%s5 + $0x40] sm:$0xff]
        %v1290 = vld [vmem:[%s5 + $0x48] sm:$0xff]
        %v1291 = vld [vmem:[%s5 + $0x50] sm:$0xff]
        %v1292 = vld [vmem:[%s5 + $0x58] sm:$0xff]
        %v1293 = vld [vmem:[%s5 + $0x60] sm:$0xff]
        %v1294 = vld [vmem:[%s5 + $0x68] sm:$0xff]
        %v1295 = vld [vmem:[%s5 + $0x70] sm:$0xff]
        %v1296 = vld [vmem:[%s5 + $0x78] sm:$0xff]
        %1298 = vset.pattern.permute.xlu0 0
        %1299 = vperm.xlu0 %1298, %v1281
        %v1300 = vpop.permute.xlu0 %1299
        %1303 = vset.pattern.permute.xlu0 0
        %1304 = vperm.xlu0 %1303, %v1282
        %v1305 = vpop.permute.xlu0 %1304
        %1308 = vset.pattern.permute.xlu0 0
        %1309 = vperm.xlu0 %1308, %v1283
        %v1310 = vpop.permute.xlu0 %1309
        %1313 = vset.pattern.permute.xlu0 0
        %1314 = vperm.xlu0 %1313, %v1284
        %v1315 = vpop.permute.xlu0 %1314
        %1318 = vset.pattern.permute.xlu0 0
        %1319 = vperm.xlu0 %1318, %v1285
        %v1320 = vpop.permute.xlu0 %1319
        %1323 = vset.pattern.permute.xlu0 0
        %1324 = vperm.xlu0 %1323, %v1286
        %v1325 = vpop.permute.xlu0 %1324
        %1328 = vset.pattern.permute.xlu0 0
        %1329 = vperm.xlu0 %1328, %v1287
        %v1330 = vpop.permute.xlu0 %1329
        %1333 = vset.pattern.permute.xlu0 0
        %1334 = vperm.xlu0 %1333, %v1288
        %v1335 = vpop.permute.xlu0 %1334
        %1338 = vset.pattern.permute.xlu0 0
        %1339 = vperm.xlu0 %1338, %v1289
        %v1340 = vpop.permute.xlu0 %1339
        %1343 = vset.pattern.permute.xlu0 0
        %1344 = vperm.xlu0 %1343, %v1290
        %v1345 = vpop.permute.xlu0 %1344
        %1348 = vset.pattern.permute.xlu0 0
        %1349 = vperm.xlu0 %1348, %v1291
        %v1350 = vpop.permute.xlu0 %1349
        %1353 = vset.pattern.permute.xlu0 0
        %1354 = vperm.xlu0 %1353, %v1292
        %v1355 = vpop.permute.xlu0 %1354
        %1358 = vset.pattern.permute.xlu0 0
        %1359 = vperm.xlu0 %1358, %v1293
        %v1360 = vpop.permute.xlu0 %1359
        %1363 = vset.pattern.permute.xlu0 0
        %1364 = vperm.xlu0 %1363, %v1294
        %v1365 = vpop.permute.xlu0 %1364
        %1368 = vset.pattern.permute.xlu0 0
        %1369 = vperm.xlu0 %1368, %v1295
        %v1370 = vpop.permute.xlu0 %1369
        %1373 = vset.pattern.permute.xlu0 0
        %1374 = vperm.xlu0 %1373, %v1296
        %v1375 = vpop.permute.xlu0 %1374
        %v1377 = vmul.f32 %v1265, %v1300
        %v1378 = vmul.f32 %v1266, %v1305
        %v1379 = vmul.f32 %v1267, %v1310
        %v1380 = vmul.f32 %v1268, %v1315
        %v1381 = vmul.f32 %v1269, %v1320
        %v1382 = vmul.f32 %v1270, %v1325
        %v1383 = vmul.f32 %v1271, %v1330
        %v1384 = vmul.f32 %v1272, %v1335
        %v1385 = vmul.f32 %v1273, %v1340
        %v1386 = vmul.f32 %v1274, %v1345
        %v1387 = vmul.f32 %v1275, %v1350
        %v1388 = vmul.f32 %v1276, %v1355
        %v1389 = vmul.f32 %v1277, %v1360
        %v1390 = vmul.f32 %v1278, %v1365
        %v1391 = vmul.f32 %v1279, %v1370
        %v1392 = vmul.f32 %v1280, %v1375
        %v1393 = vadd.f32 %v1377, %v1378
        %v1394 = vadd.f32 %v1393, %v1379
        %v1395 = vadd.f32 %v1394, %v1380
        %v1396 = vadd.f32 %v1395, %v1381
        %v1397 = vadd.f32 %v1396, %v1382
        %v1398 = vadd.f32 %v1397, %v1383
        %v1399 = vadd.f32 %v1398, %v1384
        %v1400 = vadd.f32 %v1399, %v1385
        %v1401 = vadd.f32 %v1400, %v1386
        %v1402 = vadd.f32 %v1401, %v1387
        %v1403 = vadd.f32 %v1402, %v1388
        %v1404 = vadd.f32 %v1403, %v1389
        %v1405 = vadd.f32 %v1404, %v1390
        %v1406 = vadd.f32 %v1405, %v1391
        %v1407 = vadd.f32 %v1406, %v1392
        %v1408 = vrot.slane %v1407, 4
        %v1409 = vadd.f32 %v1407, %v1408
        %v1410 = vrot.slane %v1409, 2
        %v1411 = vadd.f32 %v1409, %v1410
        %v1412 = vrot.slane %v1411, 1
        %v1413 = vadd.f32 %v1411, %v1412
        %v1414 = vld [vmem:[#allocation2] sm:$0x1]
        %1416 = vset.pattern.permute.xlu0 0
        %1417 = vperm.xlu0 %1416, %v1414
        %v1418 = vpop.permute.xlu0 %1417
        %v1420 = vlaneseq
        %v1421 = vshrl.u32 %v1420, 7
        %v1422 = vsub.s32 0, %v1421
        %v1423 = vrot.slane %v1418, %v1422
        %v1424 = vadd.f32 %v1413, %v1423
        %v1425 = vxor.u32 %v1424, 2147483648
        %v1426 = vmul.f32 %v1425, 1.442695
        %v1427 = vpow.pop %v1426
        %v1428 = vadd.f32 %v1427, 1.0
        %v1429 = vrcp.pop %v1428
        %v1430 = vmul.f32 1.0, %v1429
        %1431 = vst [vmem:[%s378] sm:$0x1] %v1430
        %s1432 = sand.u32 %s183, 1
        %s1433 = scalar_lea.sflag [#allocation5], %s1432
        %s1434 = sand.u32 %s183, 1
        %s1435 = scalar_lea.vmem [#allocation4], %s1434
        // Predicated region
        $region90: #{tpu_custom_call.1} parent=84 // pred_check
          %p1436 = pneg %p193
        $region91: #{tpu_custom_call.1} parent=84 // pred_check_branch
          %1438 = sbr.rel (%p1436) target = $region93
        $region92: #{tpu_custom_call.1} parent=84 // pred_region
          %s1440 = ssub.s32 16, 16
          %1441 = vsyncadd %s1433, %s1440
          %s1442 = smul.addr %s23, 16
          %s1443 = scalar_lea.hbm %s7, %s1442
          %s1445 = sshll.u32 %s1435, 4
          %s1446 = int_to_ptr.vmem [resolvable:$true] %s1445
          %1448 = dma.vmem_to_hbm [thread:$0]  %s1446, 16, %s1443, %s1433
        $region93: #{tpu_custom_call.1} parent=84 // pred_fallthru
          _
      $region85: #{tpu_custom_call.1} parent=5 // pred_fallthru
        _
      %p1449 = scmp.le.s32.totalorder 2, %s18
      // Predicated region
      $region94: #{tpu_custom_call.1} parent=5 // pred_check
        %p1450 = pneg %p1449
      $region95: #{tpu_custom_call.1} parent=5 // pred_check_branch
        %1452 = sbr.rel (%p1450) target = $region97
      $region96: #{tpu_custom_call.1} parent=5 // pred_region
        %s1453 = ssub.s32 %s18, 2
        // Predicated region
        $region98: #{tpu_custom_call.1} parent=96 // pred_check
          %p1454 = pneg %p199
        $region99: #{tpu_custom_call.1} parent=96 // pred_check_branch
          %1456 = sbr.rel (%p1454) target = $region101
        $region100: #{tpu_custom_call.1} parent=96 // pred_region
          %s1457 = sand.u32 %s184, 1
          %s1458 = scalar_lea.sflag [#allocation5], %s1457
          %s1459 = sand.u32 %s184, 1
          %s1460 = scalar_lea.vmem [#allocation4], %s1459
          %1461 = dma.done %s1458, 16
        $region101: #{tpu_custom_call.1} parent=96 // pred_fallthru
          _
      $region97: #{tpu_custom_call.1} parent=5 // pred_fallthru
        _
    $region6: #{tpu_custom_call.1} parent=1 // loop_footer
      %s22 = sadd.s32 1, %s18
    $region7: #{tpu_custom_call.1} parent=1 // loop_footer_branch
      %17 = sbr.rel target = $region3
    $region8: #{tpu_custom_call.1} parent=1 // loop_exit
      _
    %1462 = vsyncpa [#allocation5], 1
    %s1463 = scalar_lea.sflag [#allocation5], 1
    %1464 = vsyncpa %s1463, 1

</llo_original>
